<compile_context>
chip_gen: v7x
topology: tpu7x:2x2x1
jax: 0.10.0
libtpu: 0.0.40
codegen_flags: <defaults>
</compile_context>

<pallas_src>
import functools

import jax
import jax.numpy as jnp
import numpy as np
from jax.experimental import pallas as pl
from jax.experimental.pallas import tpu as pltpu


def _round_up(n, m):
    return ((n + m - 1) // m) * m


# --------------------------------------------------------------------------
# Kernel
# --------------------------------------------------------------------------
def gaze_kernel(x_ref, w0_ref, w1_ref, m0_ref, m1_ref, m2_ref, vec_ref,
                out_ref, *, H2p):
    f32 = jnp.float32
    bf16 = jnp.bfloat16

    # (TB, 8) f32 tile: 6 real features, col 6 == 1.0 (bias feature), col 7 == 0.
    x = x_ref[...].astype(bf16)

    # Bias / BN-scale / BN-shift rows (f32), stored at 8-row aligned sublane
    # offsets; loaded once per grid step and broadcast against (TB, lanes).
    s0 = vec_ref[0:1, :]
    h0 = vec_ref[8:9, :]
    b1 = vec_ref[16:17, :]
    s1 = vec_ref[24:25, :]
    h1 = vec_ref[32:33, :]
    mb0 = vec_ref[40:41, :]
    ms0 = vec_ref[48:49, :]
    mh0 = vec_ref[56:57, :]
    mb1 = vec_ref[64:65, 0:H2p]
    b2 = vec_ref[72:73, 0:H2p]

    # Branch block0 (3 -> H/2 per branch, fused block-diagonal; bias folded
    # into W0 via the constant-1 input column): no residual.
    z1 = jnp.maximum(
        jnp.dot(x, w0_ref[...], preferred_element_type=f32), 0.0) * s0 + h0
    # Branch block1 (H/2 -> H/2 per branch, fused): residual.  Columns are
    # already [gaze_out | sphere_out] == torch "combined".
    z2 = (jnp.maximum(
        jnp.dot(z1.astype(bf16), w1_ref[...], preferred_element_type=f32) + b1,
        0.0) * s1 + h1) + z1
    # Main block0 (H -> H): residual.
    m1 = (jnp.maximum(
        jnp.dot(z2.astype(bf16), m0_ref[...], preferred_element_type=f32) + mb0,
        0.0) * ms0 + mh0) + z2
    # Main block1 (H -> H/2): no residual; its BatchNorm is folded into M2/b2.
    h2 = jnp.maximum(
        jnp.dot(m1.astype(bf16), m1_ref[...], preferred_element_type=f32) + mb1,
        0.0)
    # Final Linear; only the 2 real output columns are stored (lane-masked vst).
    y = jnp.dot(h2.astype(bf16), m2_ref[...], preferred_element_type=f32) + b2
    out_ref[...] = y[:, 0:2]


# --------------------------------------------------------------------------
# Parameter construction (deterministic) and wrapper-side packing
# --------------------------------------------------------------------------
def init_raw_params(key, hidden_size=32):
    """Per-layer params; BatchNorm (eval) pre-folded to (scale, shift)."""
    H = hidden_size
    H2 = H // 2
    keys = iter(jax.random.split(key, 64))

    def lin(n_in, n_out):
        w = jax.random.normal(next(keys), (n_in, n_out), jnp.float32) / jnp.sqrt(
            jnp.float32(n_in))
        b = 0.05 * jax.random.normal(next(keys), (n_out,), jnp.float32)
        return w, b

    def bn(n):
        gamma = 1.0 + 0.1 * jax.random.normal(next(keys), (n,), jnp.float32)
        beta = 0.1 * jax.random.normal(next(keys), (n,), jnp.float32)
        mean = 0.1 * jax.random.normal(next(keys), (n,), jnp.float32)
        var = 0.9 + 0.1 * jnp.abs(jax.random.normal(next(keys), (n,), jnp.float32))
        scale = gamma * jax.lax.rsqrt(var + 1e-5)
        shift = beta - mean * scale
        return scale, shift

    p = {}
    p["gw0"], p["gb0"] = lin(3, H2)
    p["gs0"], p["gh0"] = bn(H2)
    p["gw1"], p["gb1"] = lin(H2, H2)
    p["gs1"], p["gh1"] = bn(H2)
    p["sw0"], p["sb0"] = lin(3, H2)
    p["ss0"], p["sh0"] = bn(H2)
    p["sw1"], p["sb1"] = lin(H2, H2)
    p["ss1"], p["sh1"] = bn(H2)
    # NOTE: attention sub-network parameters are omitted on purpose — its
    # output never feeds the value returned by the reference forward.
    p["mw0"], p["mb0"] = lin(H, H)
    p["ms0"], p["mh0"] = bn(H)
    p["mw1"], p["mb1"] = lin(H, H2)
    p["ms1"], p["mh1"] = bn(H2)
    p["mw2"], p["mb2"] = lin(H2, 2)
    return p


def pack_params(raw, hidden_size):
    """Pack params into 5 bf16 weight slabs + 1 f32 VEC of bias/BN rows."""
    H = hidden_size
    H2 = H // 2
    Hp = _round_up(max(H, 128), 128)
    H2p = _round_up(max(H2, 128), 128)
    r = {k: np.asarray(v, np.float32) for k, v in raw.items()}

    def pad2(a, rows, cols):
        out = np.zeros((rows, cols), np.float32)
        out[:a.shape[0], :a.shape[1]] = a
        return out

    # Block-diagonal fused branch weights (gaze -> lanes [0:H2], sphere -> [H2:H]).
    # Row 6 carries the fused first-layer biases (input column 6 is constant 1).
    W0 = np.zeros((8, Hp), np.float32)
    W0[0:3, 0:H2] = r["gw0"]
    W0[3:6, H2:H] = r["sw0"]
    W0[6, 0:H2] = r["gb0"]
    W0[6, H2:H] = r["sb0"]

    W1 = np.zeros((Hp, Hp), np.float32)
    W1[0:H2, 0:H2] = r["gw1"]
    W1[H2:H, H2:H] = r["sw1"]

    M0 = pad2(r["mw0"], Hp, Hp)
    M1 = pad2(r["mw1"], Hp, H2p)

    # Fold the last main block's BatchNorm into the final Linear (exact; no
    # residual taps that BN output).
    W2f = r["ms1"][:, None] * r["mw2"]                           # (H2, 2)
    b2f = r["mh1"][None, :] @ r["mw2"] + r["mb2"][None, :]       # (1, 2)
    M2 = pad2(W2f, H2p, H2p)

    def cat_row(g, s):
        v = np.zeros((Hp,), np.float32)
        v[0:H2] = g
        v[H2:H] = s
        return v

    def pad_row(v):
        o = np.zeros((Hp,), np.float32)
        flat = np.ravel(v)
        o[:flat.shape[0]] = flat
        return o

    rows = [
        cat_row(r["gs0"], r["ss0"]),      # s0
        cat_row(r["gh0"], r["sh0"]),      # h0
        cat_row(r["gb1"], r["sb1"]),      # b1
        cat_row(r["gs1"], r["ss1"]),      # s1
        cat_row(r["gh1"], r["sh1"]),      # h1
        pad_row(r["mb0"]),                # mb0
        pad_row(r["ms0"]),                # ms0
        pad_row(r["mh0"]),                # mh0
        pad_row(r["mb1"]),                # mb1
        pad_row(b2f),                     # b2 (BN-folded)
    ]
    VEC = np.zeros((8 * len(rows), Hp), np.float32)
    for i, v in enumerate(rows):
        VEC[8 * i, :] = v                 # 8-row (sublane-tile) aligned offsets

    bf = jnp.bfloat16
    weights = dict(
        W0=jnp.asarray(W0, bf), W1=jnp.asarray(W1, bf),
        M0=jnp.asarray(M0, bf), M1=jnp.asarray(M1, bf), M2=jnp.asarray(M2, bf),
        VEC=jnp.asarray(VEC, jnp.float32),
    )
    return weights, Hp, H2p


# --------------------------------------------------------------------------
# Wrapper
# --------------------------------------------------------------------------
def gaze_model_forward(x, packed, *, tb_max=1024):
    weights, Hp, H2p = packed
    B = x.shape[0]

    # Pad batch to a multiple of 8 (sublane), pick a batch tile, then pad the
    # batch to a multiple of the tile so the grid divides evenly.
    Bp = _round_up(B, 8)
    TB = min(tb_max, Bp)
    Bp = _round_up(Bp, TB)

    # Pad the 6 input features to 8; column 6 is the constant-1 bias feature.
    x8 = jnp.zeros((Bp, 8), jnp.float32)
    x8 = x8.at[:B, 0:6].set(x.astype(jnp.float32))
    x8 = x8.at[:, 6].set(1.0)

    W0, W1, M0, M1, M2, VEC = (weights[k]
                               for k in ("W0", "W1", "M0", "M1", "M2", "VEC"))

    grid = (Bp // TB,)
    batch_spec = pl.BlockSpec((TB, 8), lambda i: (i, 0))
    out_spec = pl.BlockSpec((TB, 2), lambda i: (i, 0))

    def resident(arr):
        # Full-array block, constant index_map -> DMA'd once, stays in VMEM.
        return pl.BlockSpec(arr.shape, lambda i: (0, 0))

    flops = 2 * Bp * (8 * Hp + Hp * Hp + Hp * Hp + Hp * H2p + H2p * H2p)
    bytes_accessed = (x8.size * 4 + VEC.size * 4 + Bp * 2 * 4
                      + sum(int(w.size) * 2 for w in (W0, W1, M0, M1, M2)))

    out = pl.pallas_call(
        functools.partial(gaze_kernel, H2p=H2p),
        grid=grid,
        out_shape=jax.ShapeDtypeStruct((Bp, 2), jnp.float32),
        in_specs=[batch_spec,
                  resident(W0), resident(W1), resident(M0), resident(M1),
                  resident(M2), resident(VEC)],
        out_specs=out_spec,
        compiler_params=pltpu.CompilerParams(
            dimension_semantics=("parallel",)),
        cost_estimate=pl.CostEstimate(flops=int(flops), transcendentals=0,
                                      bytes_accessed=int(bytes_accessed)),
    )(x8, W0, W1, M0, M1, M2, VEC)
    return out[:B]


# Pure-JAX reference (unfused, unpadded, f32) for correctness checking.
def reference_forward(x, raw):
    def block(v, w, b, s, h):
        return jnp.maximum(v @ w + b, 0.0) * s + h

    g = x[:, :3]
    sp = x[:, 3:]
    g1 = block(g, raw["gw0"], raw["gb0"], raw["gs0"], raw["gh0"])
    g2 = block(g1, raw["gw1"], raw["gb1"], raw["gs1"], raw["gh1"]) + g1
    s1 = block(sp, raw["sw0"], raw["sb0"], raw["ss0"], raw["sh0"])
    s2 = block(s1, raw["sw1"], raw["sb1"], raw["ss1"], raw["sh1"]) + s1
    comb = jnp.concatenate([g2, s2], axis=1)
    m1 = block(comb, raw["mw0"], raw["mb0"], raw["ms0"], raw["mh0"]) + comb
    m2 = block(m1, raw["mw1"], raw["mb1"], raw["ms1"], raw["mh1"])
    return m2 @ raw["mw2"] + raw["mb2"]


if __name__ == "__main__":
    key = jax.random.PRNGKey(0)
    kx, kp = jax.random.split(key)

    B, HIDDEN = 8, 32          # small shapes; torch default is hidden_size=256
    x = jax.random.normal(kx, (B, 6), jnp.float32)
    raw = init_raw_params(kp, hidden_size=HIDDEN)
    packed = pack_params(raw, hidden_size=HIDDEN)

    out = gaze_model_forward(x, packed)
    out = jax.block_until_ready(out)
    assert out.shape == (B, 2) and out.dtype == jnp.float32

    ref = reference_forward(x, raw)
    max_err = float(jnp.max(jnp.abs(out - ref)))
    # bf16 MXU operands (f32 accumulation) vs an all-f32 reference.
    assert max_err < 1e-1, f"mismatch vs reference: {max_err}"
    # TODO(synk): training-mode BatchNorm statistics update / Dropout sampling not modeled (eval only).
    print("KERNEL_OK")
</pallas_src>

<mosaic_0001>
module attributes {stable_mosaic.version = 11 : i64} {
  func.func @gaze_kernel(%arg0: i32, %arg1: memref<8x8xf32, #tpu.memory_space<vmem>>, %arg2: memref<8x128xbf16, #tpu.memory_space<vmem>>, %arg3: memref<128x128xbf16, #tpu.memory_space<vmem>>, %arg4: memref<128x128xbf16, #tpu.memory_space<vmem>>, %arg5: memref<128x128xbf16, #tpu.memory_space<vmem>>, %arg6: memref<128x128xbf16, #tpu.memory_space<vmem>>, %arg7: memref<80x128xf32, #tpu.memory_space<vmem>>, %arg8: memref<8x2xf32, #tpu.memory_space<vmem>>) attributes {dimension_semantics = [#tpu.dimension_semantics<parallel>], iteration_bounds = array<i64: 1>, scalar_prefetch = 0 : i64, scratch_operands = 0 : i64, tpu.core_type = #tpu.core_type<tc>, window_params = [{transform_indices = @transform_0, window_bounds = array<i64: 8, 8>}, {pipeline_mode = #tpu.pipeline_mode<synchronous>, transform_indices = @transform_1, window_bounds = array<i64: 8, 128>}, {pipeline_mode = #tpu.pipeline_mode<synchronous>, transform_indices = @transform_2, window_bounds = array<i64: 128, 128>}, {pipeline_mode = #tpu.pipeline_mode<synchronous>, transform_indices = @transform_3, window_bounds = array<i64: 128, 128>}, {pipeline_mode = #tpu.pipeline_mode<synchronous>, transform_indices = @transform_4, window_bounds = array<i64: 128, 128>}, {pipeline_mode = #tpu.pipeline_mode<synchronous>, transform_indices = @transform_5, window_bounds = array<i64: 128, 128>}, {pipeline_mode = #tpu.pipeline_mode<synchronous>, transform_indices = @transform_6, window_bounds = array<i64: 80, 128>}, {transform_indices = @transform_7, window_bounds = array<i64: 8, 2>}]} {
    %c0 = arith.constant 0 : index
    %c0_0 = arith.constant 0 : index
    %0 = vector.load %arg1[%c0, %c0_0] : memref<8x8xf32, #tpu.memory_space<vmem>>, vector<8x8xf32>
    %1 = arith.truncf %0 : vector<8x8xf32> to vector<8x8xbf16>
    %c0_1 = arith.constant 0 : index
    %c0_2 = arith.constant 0 : index
    %2 = vector.load %arg7[%c0_1, %c0_2] : memref<80x128xf32, #tpu.memory_space<vmem>>, vector<1x128xf32>
    %c8 = arith.constant 8 : index
    %c0_3 = arith.constant 0 : index
    %3 = vector.load %arg7[%c8, %c0_3] : memref<80x128xf32, #tpu.memory_space<vmem>>, vector<1x128xf32>
    %c16 = arith.constant 16 : index
    %c0_4 = arith.constant 0 : index
    %4 = vector.load %arg7[%c16, %c0_4] : memref<80x128xf32, #tpu.memory_space<vmem>>, vector<1x128xf32>
    %c24 = arith.constant 24 : index
    %c0_5 = arith.constant 0 : index
    %5 = vector.load %arg7[%c24, %c0_5] : memref<80x128xf32, #tpu.memory_space<vmem>>, vector<1x128xf32>
    %c32 = arith.constant 32 : index
    %c0_6 = arith.constant 0 : index
    %6 = vector.load %arg7[%c32, %c0_6] : memref<80x128xf32, #tpu.memory_space<vmem>>, vector<1x128xf32>
    %c40 = arith.constant 40 : index
    %c0_7 = arith.constant 0 : index
    %7 = vector.load %arg7[%c40, %c0_7] : memref<80x128xf32, #tpu.memory_space<vmem>>, vector<1x128xf32>
    %c48 = arith.constant 48 : index
    %c0_8 = arith.constant 0 : index
    %8 = vector.load %arg7[%c48, %c0_8] : memref<80x128xf32, #tpu.memory_space<vmem>>, vector<1x128xf32>
    %c56 = arith.constant 56 : index
    %c0_9 = arith.constant 0 : index
    %9 = vector.load %arg7[%c56, %c0_9] : memref<80x128xf32, #tpu.memory_space<vmem>>, vector<1x128xf32>
    %c64 = arith.constant 64 : index
    %c0_10 = arith.constant 0 : index
    %10 = vector.load %arg7[%c64, %c0_10] : memref<80x128xf32, #tpu.memory_space<vmem>>, vector<1x128xf32>
    %c72 = arith.constant 72 : index
    %c0_11 = arith.constant 0 : index
    %11 = vector.load %arg7[%c72, %c0_11] : memref<80x128xf32, #tpu.memory_space<vmem>>, vector<1x128xf32>
    %c0_12 = arith.constant 0 : index
    %c0_13 = arith.constant 0 : index
    %12 = vector.load %arg2[%c0_12, %c0_13] : memref<8x128xbf16, #tpu.memory_space<vmem>>, vector<8x128xbf16>
    %cst = arith.constant dense<0.000000e+00> : vector<8x128xf32>
    %13 = tpu.matmul %1, %12, %cst {dimension_numbers = #tpu.dot_dimension_numbers<[1], [0], [0], [1], [0, 0, 1, 1], [], []>} : vector<8x8xbf16>, vector<8x128xbf16>, vector<8x128xf32> -> vector<8x128xf32>
    %cst_14 = arith.constant 0.000000e+00 : f32
    %14 = vector.broadcast %cst_14 : f32 to vector<8x128xf32>
    %15 = arith.maximumf %13, %14 : vector<8x128xf32>
    %16 = vector.broadcast %2 : vector<1x128xf32> to vector<8x128xf32>
    %17 = arith.mulf %15, %16 : vector<8x128xf32>
    %18 = vector.broadcast %3 : vector<1x128xf32> to vector<8x128xf32>
    %19 = arith.addf %17, %18 : vector<8x128xf32>
    %20 = arith.truncf %19 : vector<8x128xf32> to vector<8x128xbf16>
    %c0_15 = arith.constant 0 : index
    %c0_16 = arith.constant 0 : index
    %21 = vector.load %arg3[%c0_15, %c0_16] : memref<128x128xbf16, #tpu.memory_space<vmem>>, vector<128x128xbf16>
    %cst_17 = arith.constant dense<0.000000e+00> : vector<8x128xf32>
    %22 = tpu.matmul %20, %21, %cst_17 {dimension_numbers = #tpu.dot_dimension_numbers<[1], [0], [0], [1], [0, 0, 1, 1], [], []>} : vector<8x128xbf16>, vector<128x128xbf16>, vector<8x128xf32> -> vector<8x128xf32>
    %23 = vector.broadcast %4 : vector<1x128xf32> to vector<8x128xf32>
    %24 = arith.addf %22, %23 : vector<8x128xf32>
    %cst_18 = arith.constant 0.000000e+00 : f32
    %25 = vector.broadcast %cst_18 : f32 to vector<8x128xf32>
    %26 = arith.maximumf %24, %25 : vector<8x128xf32>
    %27 = vector.broadcast %5 : vector<1x128xf32> to vector<8x128xf32>
    %28 = arith.mulf %26, %27 : vector<8x128xf32>
    %29 = vector.broadcast %6 : vector<1x128xf32> to vector<8x128xf32>
    %30 = arith.addf %28, %29 : vector<8x128xf32>
    %31 = arith.addf %30, %19 : vector<8x128xf32>
    %32 = arith.truncf %31 : vector<8x128xf32> to vector<8x128xbf16>
    %c0_19 = arith.constant 0 : index
    %c0_20 = arith.constant 0 : index
    %33 = vector.load %arg4[%c0_19, %c0_20] : memref<128x128xbf16, #tpu.memory_space<vmem>>, vector<128x128xbf16>
    %cst_21 = arith.constant dense<0.000000e+00> : vector<8x128xf32>
    %34 = tpu.matmul %32, %33, %cst_21 {dimension_numbers = #tpu.dot_dimension_numbers<[1], [0], [0], [1], [0, 0, 1, 1], [], []>} : vector<8x128xbf16>, vector<128x128xbf16>, vector<8x128xf32> -> vector<8x128xf32>
    %35 = vector.broadcast %7 : vector<1x128xf32> to vector<8x128xf32>
    %36 = arith.addf %34, %35 : vector<8x128xf32>
    %cst_22 = arith.constant 0.000000e+00 : f32
    %37 = vector.broadcast %cst_22 : f32 to vector<8x128xf32>
    %38 = arith.maximumf %36, %37 : vector<8x128xf32>
    %39 = vector.broadcast %8 : vector<1x128xf32> to vector<8x128xf32>
    %40 = arith.mulf %38, %39 : vector<8x128xf32>
    %41 = vector.broadcast %9 : vector<1x128xf32> to vector<8x128xf32>
    %42 = arith.addf %40, %41 : vector<8x128xf32>
    %43 = arith.addf %42, %31 : vector<8x128xf32>
    %44 = arith.truncf %43 : vector<8x128xf32> to vector<8x128xbf16>
    %c0_23 = arith.constant 0 : index
    %c0_24 = arith.constant 0 : index
    %45 = vector.load %arg5[%c0_23, %c0_24] : memref<128x128xbf16, #tpu.memory_space<vmem>>, vector<128x128xbf16>
    %cst_25 = arith.constant dense<0.000000e+00> : vector<8x128xf32>
    %46 = tpu.matmul %44, %45, %cst_25 {dimension_numbers = #tpu.dot_dimension_numbers<[1], [0], [0], [1], [0, 0, 1, 1], [], []>} : vector<8x128xbf16>, vector<128x128xbf16>, vector<8x128xf32> -> vector<8x128xf32>
    %47 = vector.broadcast %10 : vector<1x128xf32> to vector<8x128xf32>
    %48 = arith.addf %46, %47 : vector<8x128xf32>
    %cst_26 = arith.constant 0.000000e+00 : f32
    %49 = vector.broadcast %cst_26 : f32 to vector<8x128xf32>
    %50 = arith.maximumf %48, %49 : vector<8x128xf32>
    %51 = arith.truncf %50 : vector<8x128xf32> to vector<8x128xbf16>
    %c0_27 = arith.constant 0 : index
    %c0_28 = arith.constant 0 : index
    %52 = vector.load %arg6[%c0_27, %c0_28] : memref<128x128xbf16, #tpu.memory_space<vmem>>, vector<128x128xbf16>
    %cst_29 = arith.constant dense<0.000000e+00> : vector<8x128xf32>
    %53 = tpu.matmul %51, %52, %cst_29 {dimension_numbers = #tpu.dot_dimension_numbers<[1], [0], [0], [1], [0, 0, 1, 1], [], []>} : vector<8x128xbf16>, vector<128x128xbf16>, vector<8x128xf32> -> vector<8x128xf32>
    %54 = vector.broadcast %11 : vector<1x128xf32> to vector<8x128xf32>
    %55 = arith.addf %53, %54 : vector<8x128xf32>
    %56 = vector.extract_strided_slice %55 {offsets = [0, 0], sizes = [8, 2], strides = [1, 1]} : vector<8x128xf32> to vector<8x2xf32>
    %c0_30 = arith.constant 0 : index
    %c0_31 = arith.constant 0 : index
    %57 = vector.load %arg8[%c0_30, %c0_31] : memref<8x2xf32, #tpu.memory_space<vmem>>, vector<8x2xf32>
    tpu.vector_store %arg8[%c0_30, %c0_31], %56 {strides = array<i32>} : memref<8x2xf32, #tpu.memory_space<vmem>>, vector<8x2xf32>,
    return
  }
  func.func @transform_0(%arg0: i32) -> (i32, i32) {
    %c0_i32 = arith.constant 0 : i32
    %c0_i32_0 = arith.constant 0 : i32
    return %arg0, %c0_i32 : i32, i32
  }
  func.func @transform_1(%arg0: i32) -> (i32, i32) {
    %c0_i32 = arith.constant 0 : i32
    %c0_i32_0 = arith.constant 0 : i32
    %c0_i32_1 = arith.constant 0 : i32
    return %c0_i32, %c0_i32_0 : i32, i32
  }
  func.func @transform_2(%arg0: i32) -> (i32, i32) {
    %c0_i32 = arith.constant 0 : i32
    %c0_i32_0 = arith.constant 0 : i32
    %c0_i32_1 = arith.constant 0 : i32
    return %c0_i32, %c0_i32_0 : i32, i32
  }
  func.func @transform_3(%arg0: i32) -> (i32, i32) {
    %c0_i32 = arith.constant 0 : i32
    %c0_i32_0 = arith.constant 0 : i32
    %c0_i32_1 = arith.constant 0 : i32
    return %c0_i32, %c0_i32_0 : i32, i32
  }
  func.func @transform_4(%arg0: i32) -> (i32, i32) {
    %c0_i32 = arith.constant 0 : i32
    %c0_i32_0 = arith.constant 0 : i32
    %c0_i32_1 = arith.constant 0 : i32
    return %c0_i32, %c0_i32_0 : i32, i32
  }
  func.func @transform_5(%arg0: i32) -> (i32, i32) {
    %c0_i32 = arith.constant 0 : i32
    %c0_i32_0 = arith.constant 0 : i32
    %c0_i32_1 = arith.constant 0 : i32
    return %c0_i32, %c0_i32_0 : i32, i32
  }
  func.func @transform_6(%arg0: i32) -> (i32, i32) {
    %c0_i32 = arith.constant 0 : i32
    %c0_i32_0 = arith.constant 0 : i32
    %c0_i32_1 = arith.constant 0 : i32
    return %c0_i32, %c0_i32_0 : i32, i32
  }
  func.func @transform_7(%arg0: i32) -> (i32, i32) {
    %c0_i32 = arith.constant 0 : i32
    %c0_i32_0 = arith.constant 0 : i32
    return %arg0, %c0_i32 : i32, i32
  }
}

</mosaic_0001>

<llo_original>
// kernel: tpu_custom_call.1
$region0: #{tpu_custom_call.1}
  #allocation0 [shape = 'u32[]', space=smem, size = 0x4, offset = 0x4, fixed_abs, tag = 'smem constant byte address 0x4 - core index']
  #allocation1 [shape = 'u32[144,128]{1,0:T(1,128)}', space=vmem, size = 0x12000, scoped, tag = 'internal scratch']
  %s0 = inlined_call_operand.hbm [shape: f32[8,8], index: 0, kind: input, shape index: {}]
  %s1 = inlined_call_operand.hbm [shape: bf16[8,128], index: 1, kind: input, shape index: {}]
  %s2 = inlined_call_operand.hbm [shape: bf16[128,128], index: 2, kind: input, shape index: {}]
  %s3 = inlined_call_operand.hbm [shape: bf16[128,128], index: 3, kind: input, shape index: {}]
  %s4 = inlined_call_operand.hbm [shape: bf16[128,128], index: 4, kind: input, shape index: {}]
  %s5 = inlined_call_operand.hbm [shape: bf16[128,128], index: 5, kind: input, shape index: {}]
  %s6 = inlined_call_operand.hbm [shape: f32[80,128], index: 6, kind: input, shape index: {}]
  %s7 = inlined_call_operand.vmem [shape: f32[8,2], index: 7, kind: output, shape index: {}]
  %s8 = sld [smem:[#allocation0]]
  $region66: #{tpu_custom_call.1} parent=0
    _
  %s10 = ssub.s32 1, %s8
  %s11 = scalar_select 0, %s10, %s8
  $region1: #{tpu_custom_call.1} parent=0
    #allocation2 [shape = 'u8[4096]{0}', space=vmem, size = 0x1000, scoped, tag = 'input window, operand 0, single buffered']
    #allocation3 [shape = 's32[1]{0}', space=sflag, size = 0x4, scoped, tag = 'scoped memory for tpu_custom_call.1']
    #allocation4 [shape = 'u8[2048]{0}', space=vmem, size = 0x800, scoped, tag = 'input window, operand 1, single buffered']
    #allocation5 [shape = 's32[1]{0}', space=sflag, size = 0x4, scoped, tag = 'scoped memory for tpu_custom_call.1']
    #allocation6 [shape = 'u8[32768]{0}', space=vmem, size = 0x8000, scoped, tag = 'input window, operand 2, single buffered']
    #allocation7 [shape = 'u8[32768]{0}', space=vmem, size = 0x8000, scoped, tag = 'input window, operand 3, single buffered']
    #allocation8 [shape = 's32[1]{0}', space=sflag, size = 0x4, scoped, tag = 'scoped memory for tpu_custom_call.1']
    #allocation9 [shape = 'u8[32768]{0}', space=vmem, size = 0x8000, scoped, tag = 'input window, operand 4, single buffered']
    #allocation10 [shape = 'u8[32768]{0}', space=vmem, size = 0x8000, scoped, tag = 'input window, operand 5, single buffered']
    #allocation11 [shape = 's32[1]{0}', space=sflag, size = 0x4, scoped, tag = 'scoped memory for tpu_custom_call.1']
    #allocation12 [shape = 'u8[40960]{0}', space=vmem, size = 0xa000, scoped, tag = 'input window, operand 6, single buffered']
    %12 = vsyncpa [#allocation3], 0
    %13 = vsyncpa [#allocation5], 0
    %14 = vsyncpa [#allocation8], 0
    %15 = vsyncpa [#allocation11], 0
    // Predicated region
    $region2: #{tpu_custom_call.1} parent=1 // pred_check
      _
    $region3: #{tpu_custom_call.1} parent=1 // pred_check_branch
      %17 = sbr.rel (0) target = $region5
    $region4: #{tpu_custom_call.1} parent=1 // pred_region
      %s19 = ssub.s32 128, 128
      %20 = vsyncadd [#allocation3], %s19
      %s22 = sshll.u32 [#allocation2], 4
      %s23 = int_to_ptr.vmem [resolvable:$true] %s22
      %25 = dma.hbm_to_vmem [thread:$0]  %s0, 128, %s23, [#allocation3]
    $region5: #{tpu_custom_call.1} parent=1 // pred_fallthru
      _
    // Predicated region
    $region6: #{tpu_custom_call.1} parent=1 // pred_check
      _
    $region7: #{tpu_custom_call.1} parent=1 // pred_check_branch
      %27 = sbr.rel (0) target = $region9
    $region8: #{tpu_custom_call.1} parent=1 // pred_region
      %s29 = ssub.s32 64, 64
      %30 = vsyncadd [#allocation5], %s29
      %s32 = sshll.u32 [#allocation4], 4
      %s33 = int_to_ptr.vmem [resolvable:$true] %s32
      %35 = dma.hbm_to_vmem [thread:$0]  %s1, 64, %s33, [#allocation5]
    $region9: #{tpu_custom_call.1} parent=1 // pred_fallthru
      _
    // Predicated region
    $region10: #{tpu_custom_call.1} parent=1 // pred_check
      _
    $region11: #{tpu_custom_call.1} parent=1 // pred_check_branch
      %37 = sbr.rel (0) target = $region13
    $region12: #{tpu_custom_call.1} parent=1 // pred_region
      %s39 = ssub.s32 1024, 1024
      %40 = vsyncadd [#allocation5], %s39
      %s41 = sshll.u32 [#allocation6], 4
      %s42 = int_to_ptr.vmem [resolvable:$true] %s41
      %47 = dma.hbm_to_vmem [thread:$0]  %s2, 1024, %s42, [#allocation5], 64, 64, 4
    $region13: #{tpu_custom_call.1} parent=1 // pred_fallthru
      _
    // Predicated region
    $region14: #{tpu_custom_call.1} parent=1 // pred_check
      _
    $region15: #{tpu_custom_call.1} parent=1 // pred_check_branch
      %49 = sbr.rel (0) target = $region17
    $region16: #{tpu_custom_call.1} parent=1 // pred_region
      %s51 = ssub.s32 1024, 1024
      %52 = vsyncadd [#allocation8], %s51
      %s53 = sshll.u32 [#allocation7], 4
      %s54 = int_to_ptr.vmem [resolvable:$true] %s53
      %59 = dma.hbm_to_vmem [thread:$0]  %s3, 1024, %s54, [#allocation8], 64, 64, 4
    $region17: #{tpu_custom_call.1} parent=1 // pred_fallthru
      _
    // Predicated region
    $region18: #{tpu_custom_call.1} parent=1 // pred_check
      _
    $region19: #{tpu_custom_call.1} parent=1 // pred_check_branch
      %61 = sbr.rel (0) target = $region21
    $region20: #{tpu_custom_call.1} parent=1 // pred_region
      %s63 = ssub.s32 1024, 1024
      %64 = vsyncadd [#allocation8], %s63
      %s65 = sshll.u32 [#allocation9], 4
      %s66 = int_to_ptr.vmem [resolvable:$true] %s65
      %71 = dma.hbm_to_vmem [thread:$0]  %s4, 1024, %s66, [#allocation8], 64, 64, 4
    $region21: #{tpu_custom_call.1} parent=1 // pred_fallthru
      _
    // Predicated region
    $region22: #{tpu_custom_call.1} parent=1 // pred_check
      _
    $region23: #{tpu_custom_call.1} parent=1 // pred_check_branch
      %73 = sbr.rel (0) target = $region25
    $region24: #{tpu_custom_call.1} parent=1 // pred_region
      %s75 = ssub.s32 1024, 1024
      %76 = vsyncadd [#allocation11], %s75
      %s77 = sshll.u32 [#allocation10], 4
      %s78 = int_to_ptr.vmem [resolvable:$true] %s77
      %83 = dma.hbm_to_vmem [thread:$0]  %s5, 1024, %s78, [#allocation11], 64, 64, 4
    $region25: #{tpu_custom_call.1} parent=1 // pred_fallthru
      _
    // Predicated region
    $region26: #{tpu_custom_call.1} parent=1 // pred_check
      _
    $region27: #{tpu_custom_call.1} parent=1 // pred_check_branch
      %85 = sbr.rel (0) target = $region29
    $region28: #{tpu_custom_call.1} parent=1 // pred_region
      %s87 = ssub.s32 1280, 1280
      %88 = vsyncadd [#allocation11], %s87
      %s89 = sshll.u32 [#allocation12], 4
      %s90 = int_to_ptr.vmem [resolvable:$true] %s89
      %95 = dma.hbm_to_vmem [thread:$0]  %s6, 1280, %s90, [#allocation11], 128, 128, 8
    $region29: #{tpu_custom_call.1} parent=1 // pred_fallthru
      _
    // Predicated region
    $region30: #{tpu_custom_call.1} parent=1 // pred_check
      _
    $region31: #{tpu_custom_call.1} parent=1 // pred_check_branch
      %97 = sbr.rel (0) target = $region33
    $region32: #{tpu_custom_call.1} parent=1 // pred_region
      %98 = dma.done [#allocation3], 128
    $region33: #{tpu_custom_call.1} parent=1 // pred_fallthru
      _
    // Predicated region
    $region34: #{tpu_custom_call.1} parent=1 // pred_check
      _
    $region35: #{tpu_custom_call.1} parent=1 // pred_check_branch
      %100 = sbr.rel (0) target = $region37
    $region36: #{tpu_custom_call.1} parent=1 // pred_region
      %101 = dma.done [#allocation5], 64
    $region37: #{tpu_custom_call.1} parent=1 // pred_fallthru
      _
    // Predicated region
    $region38: #{tpu_custom_call.1} parent=1 // pred_check
      _
    $region39: #{tpu_custom_call.1} parent=1 // pred_check_branch
      %103 = sbr.rel (0) target = $region41
    $region40: #{tpu_custom_call.1} parent=1 // pred_region
      %104 = dma.done [#allocation5], 1024
    $region41: #{tpu_custom_call.1} parent=1 // pred_fallthru
      _
    // Predicated region
    $region42: #{tpu_custom_call.1} parent=1 // pred_check
      _
    $region43: #{tpu_custom_call.1} parent=1 // pred_check_branch
      %106 = sbr.rel (0) target = $region45
    $region44: #{tpu_custom_call.1} parent=1 // pred_region
      %107 = dma.done [#allocation8], 1024
    $region45: #{tpu_custom_call.1} parent=1 // pred_fallthru
      _
    // Predicated region
    $region46: #{tpu_custom_call.1} parent=1 // pred_check
      _
    $region47: #{tpu_custom_call.1} parent=1 // pred_check_branch
      %109 = sbr.rel (0) target = $region49
    $region48: #{tpu_custom_call.1} parent=1 // pred_region
      %110 = dma.done [#allocation8], 1024
    $region49: #{tpu_custom_call.1} parent=1 // pred_fallthru
      _
    // Predicated region
    $region50: #{tpu_custom_call.1} parent=1 // pred_check
      _
    $region51: #{tpu_custom_call.1} parent=1 // pred_check_branch
      %112 = sbr.rel (0) target = $region53
    $region52: #{tpu_custom_call.1} parent=1 // pred_region
      %113 = dma.done [#allocation11], 1024
    $region53: #{tpu_custom_call.1} parent=1 // pred_fallthru
      _
    // Predicated region
    $region54: #{tpu_custom_call.1} parent=1 // pred_check
      _
    $region55: #{tpu_custom_call.1} parent=1 // pred_check_branch
      %115 = sbr.rel (0) target = $region57
    $region56: #{tpu_custom_call.1} parent=1 // pred_region
      %116 = dma.done [#allocation11], 1280
    $region57: #{tpu_custom_call.1} parent=1 // pred_fallthru
      _
    %v118 = vld [vmem:[#allocation2] sm:$0xff]
    %v119 = vpack.c.bf16 %v118, %v118
    %v120 = vld [vmem:[#allocation12] sm:$0x1]
    %v121 = vld [vmem:[#allocation12 + $0x8] sm:$0x1]
    %v122 = vld [vmem:[#allocation12 + $0x10] sm:$0x1]
    %v123 = vld [vmem:[#allocation12 + $0x18] sm:$0x1]
    %v124 = vld [vmem:[#allocation12 + $0x20] sm:$0x1]
    %v125 = vld [vmem:[#allocation12 + $0x28] sm:$0x1]
    %v126 = vld [vmem:[#allocation12 + $0x30] sm:$0x1]
    %v127 = vld [vmem:[#allocation12 + $0x38] sm:$0x1]
    %v128 = vld [vmem:[#allocation12 + $0x40] sm:$0x1]
    %v129 = vld [vmem:[#allocation12 + $0x48] sm:$0x1]
    %v130 = vld [vmem:[#allocation4] sm:$0xf]
    %vm131 = vcmask 64512
    %v133 = vsel %vm131, %v119, 0
    %vm135 = vcmask 1043456
    %v137 = vsel %vm135, %v130, 0
    %139 = vmatprep.subr.bf16.mxu0 0
    %140 = vmatpush1.bf16.msra.mxu0 %v137
    %141 = vmatprep.subr.bf16.mxu0 0
    %142 = vmatpush1.bf16.msra.mxu0 0
    %143 = vmatprep.subr.bf16.mxu0 0
    %144 = vmatpush1.bf16.msra.mxu0 0
    %145 = vmatprep.subr.bf16.mxu0 0
    %146 = vmatpush1.bf16.msra.mxu0 0
    %147 = vmatprep.subr.bf16.mxu0 0
    %148 = vmatpush1.bf16.msra.mxu0 0
    %149 = vmatprep.subr.bf16.mxu0 0
    %150 = vmatpush1.bf16.msra.mxu0 0
    %151 = vmatprep.subr.bf16.mxu0 0
    %152 = vmatpush1.bf16.msra.mxu0 0
    %153 = vmatprep.subr.bf16.mxu0 0
    %154 = vmatpush1.bf16.msra.mxu0 0
    %155 = vmatprep.subr.bf16.mxu0 0
    %156 = vmatpush1.bf16.msra.mxu0 0
    %157 = vmatprep.subr.bf16.mxu0 0
    %158 = vmatpush1.bf16.msra.mxu0 0
    %159 = vmatprep.subr.bf16.mxu0 0
    %160 = vmatpush1.bf16.msra.mxu0 0
    %161 = vmatprep.subr.bf16.mxu0 0
    %162 = vmatpush1.bf16.msra.mxu0 0
    %163 = vmatprep.subr.bf16.mxu0 0
    %164 = vmatpush1.bf16.msra.mxu0 0
    %165 = vmatprep.subr.bf16.mxu0 0
    %166 = vmatpush1.bf16.msra.mxu0 0
    %167 = vmatprep.subr.bf16.mxu0 0
    %168 = vmatpush1.bf16.msra.mxu0 0
    %169 = vmatprep.subr.bf16.mxu0 0
    %170 = vmatpush1.bf16.msra.mxu0 0
    %171 = vmatprep.mubr.bf16.mxu0 0
    %172 = vmatmul.mubr.bf16.gmra.mrb[0].mxu0 %v133
    %v173 = vpop.f32.mrb[0].mxu0
    %v174 = vadd.f32 0.0, %v173
    %v175 = vpop.f32.mrb[0].mxu0
    %v176 = vpop.f32.mrb[0].mxu0
    %v177 = vpop.f32.mrb[0].mxu0
    %178 = vdwg.mxu0
    %v179 = vmax.f32 %v174, 0.0
    %v180 = vlaneseq
    %v181 = vshrl.u32 %v180, 7
    %v182 = vsub.s32 0, %v181
    %v183 = vrot.slane %v120, %v182
    %v184 = vmul.f32 %v179, %v183
    %v185 = vlaneseq
    %v186 = vshrl.u32 %v185, 7
    %v187 = vsub.s32 0, %v186
    %v188 = vrot.slane %v121, %v187
    %v189 = vadd.f32 %v184, %v188
    %v190 = vpack.c.bf16 %v189, %v189
    %v191 = vld [vmem:[#allocation6] sm:$0xf]
    %v192 = vld [vmem:[#allocation6 + $0x4] sm:$0xf]
    %v193 = vld [vmem:[#allocation6 + $0x8] sm:$0xf]
    %v194 = vld [vmem:[#allocation6 + $0xc] sm:$0xf]
    %v195 = vld [vmem:[#allocation6 + $0x10] sm:$0xf]
    %v196 = vld [vmem:[#allocation6 + $0x14] sm:$0xf]
    %v197 = vld [vmem:[#allocation6 + $0x18] sm:$0xf]
    %v198 = vld [vmem:[#allocation6 + $0x1c] sm:$0xf]
    %v199 = vld [vmem:[#allocation6 + $0x20] sm:$0xf]
    %v200 = vld [vmem:[#allocation6 + $0x24] sm:$0xf]
    %v201 = vld [vmem:[#allocation6 + $0x28] sm:$0xf]
    %v202 = vld [vmem:[#allocation6 + $0x2c] sm:$0xf]
    %v203 = vld [vmem:[#allocation6 + $0x30] sm:$0xf]
    %v204 = vld [vmem:[#allocation6 + $0x34] sm:$0xf]
    %v205 = vld [vmem:[#allocation6 + $0x38] sm:$0xf]
    %v206 = vld [vmem:[#allocation6 + $0x3c] sm:$0xf]
    %v207 = vlaneseq
    %v208 = vshrl.u32 %v207, 7
    %v209 = vsub.s32 0, %v208
    %v210 = vrot.slane %v122, %v209
    %v227 = vunpack.c.l.b16 %v191
    %v228 = vunpack.c.l.b16 %v192
    %v229 = vunpack.c.l.b16 %v193
    %v230 = vunpack.c.l.b16 %v194
    %v231 = vunpack.c.l.b16 %v195
    %v232 = vunpack.c.l.b16 %v196
    %v233 = vunpack.c.l.b16 %v197
    %v234 = vunpack.c.l.b16 %v198
    %v235 = vunpack.c.l.b16 %v199
    %v236 = vunpack.c.l.b16 %v200
    %v237 = vunpack.c.l.b16 %v201
    %v238 = vunpack.c.l.b16 %v202
    %v239 = vunpack.c.l.b16 %v203
    %v240 = vunpack.c.l.b16 %v204
    %v241 = vunpack.c.l.b16 %v205
    %v242 = vunpack.c.l.b16 %v206
    %v243 = vpack.c.b16 %v228, %v227
    %v244 = vpack.c.b16 %v230, %v229
    %v245 = vpack.c.b16 %v232, %v231
    %v246 = vpack.c.b16 %v234, %v233
    %v247 = vpack.c.b16 %v236, %v235
    %v248 = vpack.c.b16 %v238, %v237
    %v249 = vpack.c.b16 %v240, %v239
    %v250 = vpack.c.b16 %v242, %v241
    %259 = vmatprep.subr.bf16.mxu0 0
    %260 = vmatpush1.bf16.msra.mxu0 %v243
    %261 = vmatprep.subr.bf16.mxu0 0
    %262 = vmatpush1.bf16.msra.mxu0 %v244
    %263 = vmatprep.subr.bf16.mxu0 0
    %264 = vmatpush1.bf16.msra.mxu0 %v245
    %265 = vmatprep.subr.bf16.mxu0 0
    %266 = vmatpush1.bf16.msra.mxu0 %v246
    %267 = vmatprep.subr.bf16.mxu0 0
    %268 = vmatpush1.bf16.msra.mxu0 %v247
    %269 = vmatprep.subr.bf16.mxu0 0
    %270 = vmatpush1.bf16.msra.mxu0 %v248
    %271 = vmatprep.subr.bf16.mxu0 0
    %272 = vmatpush1.bf16.msra.mxu0 %v249
    %273 = vmatprep.subr.bf16.mxu0 0
    %274 = vmatpush1.bf16.msra.mxu0 %v250
    %275 = vmatprep.subr.bf16.mxu0 0
    %276 = vmatpush1.bf16.msra.mxu0 0
    %277 = vmatprep.subr.bf16.mxu0 0
    %278 = vmatpush1.bf16.msra.mxu0 0
    %279 = vmatprep.subr.bf16.mxu0 0
    %280 = vmatpush1.bf16.msra.mxu0 0
    %281 = vmatprep.subr.bf16.mxu0 0
    %282 = vmatpush1.bf16.msra.mxu0 0
    %283 = vmatprep.subr.bf16.mxu0 0
    %284 = vmatpush1.bf16.msra.mxu0 0
    %285 = vmatprep.subr.bf16.mxu0 0
    %286 = vmatpush1.bf16.msra.mxu0 0
    %287 = vmatprep.subr.bf16.mxu0 0
    %288 = vmatpush1.bf16.msra.mxu0 0
    %289 = vmatprep.subr.bf16.mxu0 0
    %290 = vmatpush1.bf16.msra.mxu0 0
    %291 = vmatprep.mubr.bf16.mxu0 0
    %292 = vmatmul.mubr.bf16.gmra.mrb[0].mxu0 %v190
    %v293 = vpop.f32.mrb[0].mxu0
    %v294 = vadd.f32 %v210, %v293
    %v295 = vpop.f32.mrb[0].mxu0
    %v296 = vpop.f32.mrb[0].mxu0
    %v297 = vpop.f32.mrb[0].mxu0
    %298 = vdwg.mxu0
    %v299 = vmax.f32 %v294, 0.0
    %v300 = vlaneseq
    %v301 = vshrl.u32 %v300, 7
    %v302 = vsub.s32 0, %v301
    %v303 = vrot.slane %v123, %v302
    %v304 = vmul.f32 %v299, %v303
    %v305 = vlaneseq
    %v306 = vshrl.u32 %v305, 7
    %v307 = vsub.s32 0, %v306
    %v308 = vrot.slane %v124, %v307
    %v309 = vadd.f32 %v304, %v308
    %v310 = vadd.f32 %v309, %v189
    %v311 = vpack.c.bf16 %v310, %v310
    %v312 = vld [vmem:[#allocation7] sm:$0xf]
    %v313 = vld [vmem:[#allocation7 + $0x4] sm:$0xf]
    %v314 = vld [vmem:[#allocation7 + $0x8] sm:$0xf]
    %v315 = vld [vmem:[#allocation7 + $0xc] sm:$0xf]
    %v316 = vld [vmem:[#allocation7 + $0x10] sm:$0xf]
    %v317 = vld [vmem:[#allocation7 + $0x14] sm:$0xf]
    %v318 = vld [vmem:[#allocation7 + $0x18] sm:$0xf]
    %v319 = vld [vmem:[#allocation7 + $0x1c] sm:$0xf]
    %v320 = vld [vmem:[#allocation7 + $0x20] sm:$0xf]
    %v321 = vld [vmem:[#allocation7 + $0x24] sm:$0xf]
    %v322 = vld [vmem:[#allocation7 + $0x28] sm:$0xf]
    %v323 = vld [vmem:[#allocation7 + $0x2c] sm:$0xf]
    %v324 = vld [vmem:[#allocation7 + $0x30] sm:$0xf]
    %v325 = vld [vmem:[#allocation7 + $0x34] sm:$0xf]
    %v326 = vld [vmem:[#allocation7 + $0x38] sm:$0xf]
    %v327 = vld [vmem:[#allocation7 + $0x3c] sm:$0xf]
    %v328 = vlaneseq
    %v329 = vshrl.u32 %v328, 7
    %v330 = vsub.s32 0, %v329
    %v331 = vrot.slane %v125, %v330
    %v348 = vunpack.c.l.b16 %v312
    %v349 = vunpack.c.l.b16 %v313
    %v350 = vunpack.c.l.b16 %v314
    %v351 = vunpack.c.l.b16 %v315
    %v352 = vunpack.c.l.b16 %v316
    %v353 = vunpack.c.l.b16 %v317
    %v354 = vunpack.c.l.b16 %v318
    %v355 = vunpack.c.l.b16 %v319
    %v356 = vunpack.c.l.b16 %v320
    %v357 = vunpack.c.l.b16 %v321
    %v358 = vunpack.c.l.b16 %v322
    %v359 = vunpack.c.l.b16 %v323
    %v360 = vunpack.c.l.b16 %v324
    %v361 = vunpack.c.l.b16 %v325
    %v362 = vunpack.c.l.b16 %v326
    %v363 = vunpack.c.l.b16 %v327
    %v364 = vpack.c.b16 %v349, %v348
    %v365 = vpack.c.b16 %v351, %v350
    %v366 = vpack.c.b16 %v353, %v352
    %v367 = vpack.c.b16 %v355, %v354
    %v368 = vpack.c.b16 %v357, %v356
    %v369 = vpack.c.b16 %v359, %v358
    %v370 = vpack.c.b16 %v361, %v360
    %v371 = vpack.c.b16 %v363, %v362
    %380 = vmatprep.subr.bf16.mxu0 0
    %381 = vmatpush1.bf16.msra.mxu0 %v364
    %382 = vmatprep.subr.bf16.mxu0 0
    %383 = vmatpush1.bf16.msra.mxu0 %v365
    %384 = vmatprep.subr.bf16.mxu0 0
    %385 = vmatpush1.bf16.msra.mxu0 %v366
    %386 = vmatprep.subr.bf16.mxu0 0
    %387 = vmatpush1.bf16.msra.mxu0 %v367
    %388 = vmatprep.subr.bf16.mxu0 0
    %389 = vmatpush1.bf16.msra.mxu0 %v368
    %390 = vmatprep.subr.bf16.mxu0 0
    %391 = vmatpush1.bf16.msra.mxu0 %v369
    %392 = vmatprep.subr.bf16.mxu0 0
    %393 = vmatpush1.bf16.msra.mxu0 %v370
    %394 = vmatprep.subr.bf16.mxu0 0
    %395 = vmatpush1.bf16.msra.mxu0 %v371
    %396 = vmatprep.subr.bf16.mxu0 0
    %397 = vmatpush1.bf16.msra.mxu0 0
    %398 = vmatprep.subr.bf16.mxu0 0
    %399 = vmatpush1.bf16.msra.mxu0 0
    %400 = vmatprep.subr.bf16.mxu0 0
    %401 = vmatpush1.bf16.msra.mxu0 0
    %402 = vmatprep.subr.bf16.mxu0 0
    %403 = vmatpush1.bf16.msra.mxu0 0
    %404 = vmatprep.subr.bf16.mxu0 0
    %405 = vmatpush1.bf16.msra.mxu0 0
    %406 = vmatprep.subr.bf16.mxu0 0
    %407 = vmatpush1.bf16.msra.mxu0 0
    %408 = vmatprep.subr.bf16.mxu0 0
    %409 = vmatpush1.bf16.msra.mxu0 0
    %410 = vmatprep.subr.bf16.mxu0 0
    %411 = vmatpush1.bf16.msra.mxu0 0
    %412 = vmatprep.mubr.bf16.mxu0 0
    %413 = vmatmul.mubr.bf16.gmra.mrb[0].mxu0 %v311
    %v414 = vpop.f32.mrb[0].mxu0
    %v415 = vadd.f32 %v331, %v414
    %v416 = vpop.f32.mrb[0].mxu0
    %v417 = vpop.f32.mrb[0].mxu0
    %v418 = vpop.f32.mrb[0].mxu0
    %419 = vdwg.mxu0
    %v420 = vmax.f32 %v415, 0.0
    %v421 = vlaneseq
    %v422 = vshrl.u32 %v421, 7
    %v423 = vsub.s32 0, %v422
    %v424 = vrot.slane %v126, %v423
    %v425 = vmul.f32 %v420, %v424
    %v426 = vlaneseq
    %v427 = vshrl.u32 %v426, 7
    %v428 = vsub.s32 0, %v427
    %v429 = vrot.slane %v127, %v428
    %v430 = vadd.f32 %v425, %v429
    %v431 = vadd.f32 %v430, %v310
    %v432 = vpack.c.bf16 %v431, %v431
    %v433 = vld [vmem:[#allocation9] sm:$0xf]
    %v434 = vld [vmem:[#allocation9 + $0x4] sm:$0xf]
    %v435 = vld [vmem:[#allocation9 + $0x8] sm:$0xf]
    %v436 = vld [vmem:[#allocation9 + $0xc] sm:$0xf]
    %v437 = vld [vmem:[#allocation9 + $0x10] sm:$0xf]
    %v438 = vld [vmem:[#allocation9 + $0x14] sm:$0xf]
    %v439 = vld [vmem:[#allocation9 + $0x18] sm:$0xf]
    %v440 = vld [vmem:[#allocation9 + $0x1c] sm:$0xf]
    %v441 = vld [vmem:[#allocation9 + $0x20] sm:$0xf]
    %v442 = vld [vmem:[#allocation9 + $0x24] sm:$0xf]
    %v443 = vld [vmem:[#allocation9 + $0x28] sm:$0xf]
    %v444 = vld [vmem:[#allocation9 + $0x2c] sm:$0xf]
    %v445 = vld [vmem:[#allocation9 + $0x30] sm:$0xf]
    %v446 = vld [vmem:[#allocation9 + $0x34] sm:$0xf]
    %v447 = vld [vmem:[#allocation9 + $0x38] sm:$0xf]
    %v448 = vld [vmem:[#allocation9 + $0x3c] sm:$0xf]
    %v449 = vlaneseq
    %v450 = vshrl.u32 %v449, 7
    %v451 = vsub.s32 0, %v450
    %v452 = vrot.slane %v128, %v451
    %v469 = vunpack.c.l.b16 %v433
    %v470 = vunpack.c.l.b16 %v434
    %v471 = vunpack.c.l.b16 %v435
    %v472 = vunpack.c.l.b16 %v436
    %v473 = vunpack.c.l.b16 %v437
    %v474 = vunpack.c.l.b16 %v438
    %v475 = vunpack.c.l.b16 %v439
    %v476 = vunpack.c.l.b16 %v440
    %v477 = vunpack.c.l.b16 %v441
    %v478 = vunpack.c.l.b16 %v442
    %v479 = vunpack.c.l.b16 %v443
    %v480 = vunpack.c.l.b16 %v444
    %v481 = vunpack.c.l.b16 %v445
    %v482 = vunpack.c.l.b16 %v446
    %v483 = vunpack.c.l.b16 %v447
    %v484 = vunpack.c.l.b16 %v448
    %v485 = vpack.c.b16 %v470, %v469
    %v486 = vpack.c.b16 %v472, %v471
    %v487 = vpack.c.b16 %v474, %v473
    %v488 = vpack.c.b16 %v476, %v475
    %v489 = vpack.c.b16 %v478, %v477
    %v490 = vpack.c.b16 %v480, %v479
    %v491 = vpack.c.b16 %v482, %v481
    %v492 = vpack.c.b16 %v484, %v483
    %501 = vmatprep.subr.bf16.mxu0 0
    %502 = vmatpush1.bf16.msra.mxu0 %v485
    %503 = vmatprep.subr.bf16.mxu0 0
    %504 = vmatpush1.bf16.msra.mxu0 %v486
    %505 = vmatprep.subr.bf16.mxu0 0
    %506 = vmatpush1.bf16.msra.mxu0 %v487
    %507 = vmatprep.subr.bf16.mxu0 0
    %508 = vmatpush1.bf16.msra.mxu0 %v488
    %509 = vmatprep.subr.bf16.mxu0 0
    %510 = vmatpush1.bf16.msra.mxu0 %v489
    %511 = vmatprep.subr.bf16.mxu0 0
    %512 = vmatpush1.bf16.msra.mxu0 %v490
    %513 = vmatprep.subr.bf16.mxu0 0
    %514 = vmatpush1.bf16.msra.mxu0 %v491
    %515 = vmatprep.subr.bf16.mxu0 0
    %516 = vmatpush1.bf16.msra.mxu0 %v492
    %517 = vmatprep.subr.bf16.mxu0 0
    %518 = vmatpush1.bf16.msra.mxu0 0
    %519 = vmatprep.subr.bf16.mxu0 0
    %520 = vmatpush1.bf16.msra.mxu0 0
    %521 = vmatprep.subr.bf16.mxu0 0
    %522 = vmatpush1.bf16.msra.mxu0 0
    %523 = vmatprep.subr.bf16.mxu0 0
    %524 = vmatpush1.bf16.msra.mxu0 0
    %525 = vmatprep.subr.bf16.mxu0 0
    %526 = vmatpush1.bf16.msra.mxu0 0
    %527 = vmatprep.subr.bf16.mxu0 0
    %528 = vmatpush1.bf16.msra.mxu0 0
    %529 = vmatprep.subr.bf16.mxu0 0
    %530 = vmatpush1.bf16.msra.mxu0 0
    %531 = vmatprep.subr.bf16.mxu0 0
    %532 = vmatpush1.bf16.msra.mxu0 0
    %533 = vmatprep.mubr.bf16.mxu0 0
    %534 = vmatmul.mubr.bf16.gmra.mrb[0].mxu0 %v432
    %v535 = vpop.f32.mrb[0].mxu0
    %v536 = vadd.f32 %v452, %v535
    %v537 = vpop.f32.mrb[0].mxu0
    %v538 = vpop.f32.mrb[0].mxu0
    %v539 = vpop.f32.mrb[0].mxu0
    %540 = vdwg.mxu0
    %v541 = vmax.f32 %v536, 0.0
    %v542 = vpack.c.bf16 %v541, %v541
    %v543 = vld [vmem:[#allocation10] sm:$0xf]
    %v544 = vld [vmem:[#allocation10 + $0x4] sm:$0xf]
    %v545 = vld [vmem:[#allocation10 + $0x8] sm:$0xf]
    %v546 = vld [vmem:[#allocation10 + $0xc] sm:$0xf]
    %v547 = vld [vmem:[#allocation10 + $0x10] sm:$0xf]
    %v548 = vld [vmem:[#allocation10 + $0x14] sm:$0xf]
    %v549 = vld [vmem:[#allocation10 + $0x18] sm:$0xf]
    %v550 = vld [vmem:[#allocation10 + $0x1c] sm:$0xf]
    %v551 = vld [vmem:[#allocation10 + $0x20] sm:$0xf]
    %v552 = vld [vmem:[#allocation10 + $0x24] sm:$0xf]
    %v553 = vld [vmem:[#allocation10 + $0x28] sm:$0xf]
    %v554 = vld [vmem:[#allocation10 + $0x2c] sm:$0xf]
    %v555 = vld [vmem:[#allocation10 + $0x30] sm:$0xf]
    %v556 = vld [vmem:[#allocation10 + $0x34] sm:$0xf]
    %v557 = vld [vmem:[#allocation10 + $0x38] sm:$0xf]
    %v558 = vld [vmem:[#allocation10 + $0x3c] sm:$0xf]
    %v559 = vlaneseq
    %v560 = vshrl.u32 %v559, 7
    %v561 = vsub.s32 0, %v560
    %v562 = vrot.slane %v129, %v561
    %v579 = vunpack.c.l.b16 %v543
    %v580 = vunpack.c.l.b16 %v544
    %v581 = vunpack.c.l.b16 %v545
    %v582 = vunpack.c.l.b16 %v546
    %v583 = vunpack.c.l.b16 %v547
    %v584 = vunpack.c.l.b16 %v548
    %v585 = vunpack.c.l.b16 %v549
    %v586 = vunpack.c.l.b16 %v550
    %v587 = vunpack.c.l.b16 %v551
    %v588 = vunpack.c.l.b16 %v552
    %v589 = vunpack.c.l.b16 %v553
    %v590 = vunpack.c.l.b16 %v554
    %v591 = vunpack.c.l.b16 %v555
    %v592 = vunpack.c.l.b16 %v556
    %v593 = vunpack.c.l.b16 %v557
    %v594 = vunpack.c.l.b16 %v558
    %v595 = vpack.c.b16 %v580, %v579
    %v596 = vpack.c.b16 %v582, %v581
    %v597 = vpack.c.b16 %v584, %v583
    %v598 = vpack.c.b16 %v586, %v585
    %v599 = vpack.c.b16 %v588, %v587
    %v600 = vpack.c.b16 %v590, %v589
    %v601 = vpack.c.b16 %v592, %v591
    %v602 = vpack.c.b16 %v594, %v593
    %611 = vmatprep.subr.bf16.mxu0 0
    %612 = vmatpush1.bf16.msra.mxu0 %v595
    %613 = vmatprep.subr.bf16.mxu0 0
    %614 = vmatpush1.bf16.msra.mxu0 %v596
    %615 = vmatprep.subr.bf16.mxu0 0
    %616 = vmatpush1.bf16.msra.mxu0 %v597
    %617 = vmatprep.subr.bf16.mxu0 0
    %618 = vmatpush1.bf16.msra.mxu0 %v598
    %619 = vmatprep.subr.bf16.mxu0 0
    %620 = vmatpush1.bf16.msra.mxu0 %v599
    %621 = vmatprep.subr.bf16.mxu0 0
    %622 = vmatpush1.bf16.msra.mxu0 %v600
    %623 = vmatprep.subr.bf16.mxu0 0
    %624 = vmatpush1.bf16.msra.mxu0 %v601
    %625 = vmatprep.subr.bf16.mxu0 0
    %626 = vmatpush1.bf16.msra.mxu0 %v602
    %627 = vmatprep.subr.bf16.mxu0 0
    %628 = vmatpush1.bf16.msra.mxu0 0
    %629 = vmatprep.subr.bf16.mxu0 0
    %630 = vmatpush1.bf16.msra.mxu0 0
    %631 = vmatprep.subr.bf16.mxu0 0
    %632 = vmatpush1.bf16.msra.mxu0 0
    %633 = vmatprep.subr.bf16.mxu0 0
    %634 = vmatpush1.bf16.msra.mxu0 0
    %635 = vmatprep.subr.bf16.mxu0 0
    %636 = vmatpush1.bf16.msra.mxu0 0
    %637 = vmatprep.subr.bf16.mxu0 0
    %638 = vmatpush1.bf16.msra.mxu0 0
    %639 = vmatprep.subr.bf16.mxu0 0
    %640 = vmatpush1.bf16.msra.mxu0 0
    %641 = vmatprep.subr.bf16.mxu0 0
    %642 = vmatpush1.bf16.msra.mxu0 0
    %643 = vmatprep.mubr.bf16.mxu0 0
    %644 = vmatmul.mubr.bf16.gmra.mrb[0].mxu0 %v542
    %v645 = vpop.f32.mrb[0].mxu0
    %v646 = vadd.f32 %v562, %v645
    %v647 = vpop.f32.mrb[0].mxu0
    %v648 = vpop.f32.mrb[0].mxu0
    %v649 = vpop.f32.mrb[0].mxu0
    %650 = vdwg.mxu0
    %vm651 = vcmask 15360
    %652 = vst.msk [vmem:[%s7] sm:$0xff] %vm651, %v646
    // Predicated region
    $region58: #{tpu_custom_call.1} parent=1 // pred_check
      _
    $region59: #{tpu_custom_call.1} parent=1 // pred_check_branch
      %654 = sbr.rel (0) target = $region61
    $region60: #{tpu_custom_call.1} parent=1 // pred_region
      _
    $region61: #{tpu_custom_call.1} parent=1 // pred_fallthru
      _
    // Predicated region
    $region62: #{tpu_custom_call.1} parent=1 // pred_check
      _
    $region63: #{tpu_custom_call.1} parent=1 // pred_check_branch
      %656 = sbr.rel (0) target = $region65
    $region64: #{tpu_custom_call.1} parent=1 // pred_region
      _
    $region65: #{tpu_custom_call.1} parent=1 // pred_fallthru
      _
    %657 = vsyncpa [#allocation3], 1
    %658 = vsyncpa [#allocation5], 1
    %659 = vsyncpa [#allocation8], 1
    %660 = vsyncpa [#allocation11], 1

</llo_original>
